<compile_context>
chip_gen: v6e
topology: v6e:2x2x1
jax: 0.10.0
libtpu: 0.0.40
codegen_flags: <defaults>
</compile_context>

<pallas_src>
import jax
import jax.numpy as jnp
import numpy as np
from jax.experimental import pallas as pl
from jax.experimental.pallas import tpu as pltpu


def _make_kernel(Cin, Cout, H, W):
    HW = H * W

    def kernel(x_ref, w_ref, b_ref, o_ref):
        # x_ref: (1, Cin, H*W)   one batch element, channels-first, spatial flat
        # w_ref: (3, Cout, 3*Cin) conv weight, w_ref[kh][co, kw*Cin + ci]
        # b_ref: (Cout, 1)        conv bias
        # o_ref: (1, Cout, H*W)
        xv = x_ref[0]                                              # (Cin, HW)

        # column index (0..W-1) of each flattened spatial position
        col = jax.lax.broadcasted_iota(jnp.int32, (Cin, HW), 1) % W
        zcol = jnp.zeros((Cin, 1), xv.dtype)

        # Horizontally shifted copies (kw = 0 and 2), zeroed at row boundaries.
        #   x_l[:, j] = x[:, j-1] (i.e. column x-1), 0 where x-1 < 0
        #   x_r[:, j] = x[:, j+1] (i.e. column x+1), 0 where x+1 >= W
        x_l = jnp.where(col == 0, 0.0,
                        jnp.concatenate([zcol, xv[:, :HW - 1]], axis=1))
        x_r = jnp.where(col == W - 1, 0.0,
                        jnp.concatenate([xv[:, 1:], zcol], axis=1))

        # Stack the three kw taps along the contraction (sublane) axis.
        s = jnp.concatenate([x_l, xv, x_r], axis=0)                # (3*Cin, HW)
        zrow = jnp.zeros((3 * Cin, W), s.dtype)

        # Start the accumulator with residual (first Cout input channels) + bias.
        acc = xv[:Cout, :] + b_ref[...]                            # (Cout, HW)

        # One MXU matmul per kernel row kh; vertical halo = whole-row shift by W
        # in flat coordinates with a zero row block filling the out-of-range rows.
        for kh in range(3):
            if kh == 0:      # uses row y-1
                op = jnp.concatenate([zrow, s[:, :HW - W]], axis=1)
            elif kh == 1:    # uses row y
                op = s
            else:            # uses row y+1
                op = jnp.concatenate([s[:, W:], zrow], axis=1)
            acc = acc + jnp.dot(w_ref[kh], op,
                                preferred_element_type=jnp.float32)

        o_ref[0] = jnp.clip(acc, -1.0, 1.0).astype(o_ref.dtype)

    return kernel


@jax.jit
def inverse_conv_forward(x, weight, bias):
    """x: (N, Cin, H, W).  weight: (Cout, Cin, 3, 3).  bias: (Cout,)."""
    N, Cin, H, W = x.shape
    Cout = weight.shape[0]
    assert Cin >= Cout, "residual x[:, :Cout] requires in_channels >= out_channels"
    HW = H * W

    # Free contiguous reshape: NCHW -> (N, C, H*W) matches memory exactly.
    x_flat = x.reshape(N, Cin, HW)
    # (Cout, Cin, kh, kw) -> (kh, Cout, kw, Cin) -> (3, Cout, 3*Cin)
    # so that w_k[kh][co, kw*Cin + ci] == weight[co, ci, kh, kw].
    w_k = jnp.transpose(weight, (2, 0, 3, 1)).reshape(3, Cout, 3 * Cin)
    b_col = bias.reshape(Cout, 1).astype(jnp.float32)

    out_flat = pl.pallas_call(
        _make_kernel(Cin, Cout, H, W),
        grid=(N,),
        in_specs=[
            pl.BlockSpec((1, Cin, HW), lambda n: (n, 0, 0)),
            pl.BlockSpec((3, Cout, 3 * Cin), lambda n: (0, 0, 0)),
            pl.BlockSpec((Cout, 1), lambda n: (0, 0)),
        ],
        out_specs=pl.BlockSpec((1, Cout, HW), lambda n: (n, 0, 0)),
        out_shape=jax.ShapeDtypeStruct((N, Cout, HW), jnp.float32),
        compiler_params=pltpu.CompilerParams(
            dimension_semantics=("parallel",)),
    )(x_flat, w_k, b_col)

    return out_flat.reshape(N, Cout, H, W)


def _reference(x, weight, bias):
    """Pure-JAX reference for correctness checking."""
    out = jax.lax.conv_general_dilated(
        x, weight, window_strides=(1, 1), padding=((1, 1), (1, 1)),
        dimension_numbers=("NCHW", "OIHW", "NCHW"))
    out = out + bias[None, :, None, None]
    out = x[:, :weight.shape[0]] + out
    return jnp.clip(out, -1.0, 1.0)


if __name__ == "__main__":
    N, in_channels, out_channels, H, W = 2, 32, 4, 16, 16
    key = jax.random.PRNGKey(0)
    kx, kw, kb = jax.random.split(key, 3)

    x = jax.random.normal(kx, (N, in_channels, H, W), jnp.float32)
    # The torch module zero-inits conv weight/bias (output would trivially be
    # clamp(x[:, :Cout], -1, 1)); use small deterministic random params instead
    # so the conv path is exercised non-trivially (already within clamp_(-2, 2)).
    weight = 0.1 * jax.random.normal(
        kw, (out_channels, in_channels, 3, 3), jnp.float32)
    bias = 0.1 * jax.random.normal(kb, (out_channels,), jnp.float32)

    out = inverse_conv_forward(x, weight, bias)
    jax.block_until_ready(out)

    out_ref = _reference(x, weight, bias)
    np.testing.assert_allclose(np.asarray(out), np.asarray(out_ref),
                               atol=1e-4, rtol=1e-4)
    assert out.shape == (N, out_channels, H, W)
    print("KERNEL_OK")
</pallas_src>

<mosaic_0001>
module attributes {stable_mosaic.version = 11 : i64} {
  func.func @kernel(%arg0: i32, %arg1: memref<1x32x256xf32, #tpu.memory_space<vmem>>, %arg2: memref<3x4x96xf32, #tpu.memory_space<vmem>>, %arg3: memref<4x1xf32, #tpu.memory_space<vmem>>, %arg4: memref<1x4x256xf32, #tpu.memory_space<vmem>>) attributes {dimension_semantics = [#tpu.dimension_semantics<parallel>], iteration_bounds = array<i64: 2>, scalar_prefetch = 0 : i64, scratch_operands = 0 : i64, tpu.core_type = #tpu.core_type<tc>, window_params = [{transform_indices = @transform_0, window_bounds = array<i64: 1, 32, 256>}, {pipeline_mode = #tpu.pipeline_mode<synchronous>, transform_indices = @transform_1, window_bounds = array<i64: 3, 4, 96>}, {pipeline_mode = #tpu.pipeline_mode<synchronous>, transform_indices = @transform_2, window_bounds = array<i64: 4, 1>}, {transform_indices = @transform_3, window_bounds = array<i64: 1, 4, 256>}]} {
    %c0 = arith.constant 0 : index
    %c0_0 = arith.constant 0 : index
    %c0_1 = arith.constant 0 : index
    %0 = vector.load %arg1[%c0, %c0_0, %c0_1] : memref<1x32x256xf32, #tpu.memory_space<vmem>>, vector<1x32x256xf32>
    %1 = vector.shape_cast %0 : vector<1x32x256xf32> to vector<32x256xf32>
    %2 = tpu.iota {dimensions = array<i32: 1>} : vector<32x256xi32>
    %c16_i32 = arith.constant 16 : i32
    %c0_i32 = arith.constant 0 : i32
    %3 = arith.cmpi eq, %c16_i32, %c0_i32 : i32
    %c1_i32 = arith.constant 1 : i32
    %4 = arith.select %3, %c1_i32, %c16_i32 : i32
    %5 = vector.broadcast %4 : i32 to vector<32x256xi32>
    %6 = arith.remsi %2, %5 : vector<32x256xi32>
    %c0_i32_2 = arith.constant 0 : i32
    %7 = vector.broadcast %c0_i32_2 : i32 to vector<32x256xi32>
    %8 = arith.cmpi ne, %6, %7 : vector<32x256xi32>
    %c0_i32_3 = arith.constant 0 : i32
    %9 = vector.broadcast %c0_i32_3 : i32 to vector<32x256xi32>
    %10 = arith.cmpi slt, %6, %9 : vector<32x256xi32>
    %c0_i32_4 = arith.constant 0 : i32
    %11 = arith.cmpi slt, %4, %c0_i32_4 : i32
    %12 = vector.broadcast %11 : i1 to vector<32x256xi1>
    %13 = vector.broadcast %12 : vector<32x256xi1> to vector<32x256xi1>
    %14 = arith.xori %10, %13 : vector<32x256xi1>
    %15 = arith.andi %14, %8 : vector<32x256xi1>
    %16 = vector.broadcast %4 : i32 to vector<32x256xi32>
    %17 = arith.addi %6, %16 : vector<32x256xi32>
    %18 = arith.select %15, %17, %6 : vector<32x256xi1>, vector<32x256xi32>
    %cst = arith.constant 0.000000e+00 : f32
    %19 = vector.broadcast %cst : f32 to vector<32x1xf32>
    %c0_i32_5 = arith.constant 0 : i32
    %20 = vector.broadcast %c0_i32_5 : i32 to vector<32x256xi32>
    %21 = arith.cmpi eq, %18, %20 : vector<32x256xi32>
    %22 = vector.extract_strided_slice %1 {offsets = [0, 0], sizes = [32, 255], strides = [1, 1]} : vector<32x256xf32> to vector<32x255xf32>
    %23 = tpu.concatenate %19, %22 in 1 : vector<32x1xf32>, vector<32x255xf32> -> vector<32x256xf32>
    %cst_6 = arith.constant 0.000000e+00 : f32
    %24 = vector.broadcast %cst_6 : f32 to vector<32x256xf32>
    %25 = arith.select %21, %24, %23 : vector<32x256xi1>, vector<32x256xf32>
    %c15_i32 = arith.constant 15 : i32
    %26 = vector.broadcast %c15_i32 : i32 to vector<32x256xi32>
    %27 = arith.cmpi eq, %18, %26 : vector<32x256xi32>
    %28 = vector.extract_strided_slice %1 {offsets = [0, 1], sizes = [32, 255], strides = [1, 1]} : vector<32x256xf32> to vector<32x255xf32>
    %29 = tpu.concatenate %28, %19 in 1 : vector<32x255xf32>, vector<32x1xf32> -> vector<32x256xf32>
    %cst_7 = arith.constant 0.000000e+00 : f32
    %30 = vector.broadcast %cst_7 : f32 to vector<32x256xf32>
    %31 = arith.select %27, %30, %29 : vector<32x256xi1>, vector<32x256xf32>
    %32 = tpu.concatenate %25, %1, %31 in 0 : vector<32x256xf32>, vector<32x256xf32>, vector<32x256xf32> -> vector<96x256xf32>
    %cst_8 = arith.constant 0.000000e+00 : f32
    %33 = vector.broadcast %cst_8 : f32 to vector<96x16xf32>
    %34 = vector.extract_strided_slice %1 {offsets = [0, 0], sizes = [4, 256], strides = [1, 1]} : vector<32x256xf32> to vector<4x256xf32>
    %c0_9 = arith.constant 0 : index
    %c0_10 = arith.constant 0 : index
    %35 = vector.load %arg3[%c0_9, %c0_10] : memref<4x1xf32, #tpu.memory_space<vmem>>, vector<4x1xf32>
    %36 = vector.broadcast %35 : vector<4x1xf32> to vector<4x256xf32>
    %37 = arith.addf %34, %36 : vector<4x256xf32>
    %38 = vector.extract_strided_slice %32 {offsets = [0, 0], sizes = [96, 240], strides = [1, 1]} : vector<96x256xf32> to vector<96x240xf32>
    %39 = tpu.concatenate %33, %38 in 1 : vector<96x16xf32>, vector<96x240xf32> -> vector<96x256xf32>
    %c0_11 = arith.constant 0 : index
    %c0_12 = arith.constant 0 : index
    %c0_13 = arith.constant 0 : index
    %40 = vector.load %arg2[%c0_11, %c0_12, %c0_13] : memref<3x4x96xf32, #tpu.memory_space<vmem>>, vector<1x4x96xf32>
    %41 = vector.shape_cast %40 : vector<1x4x96xf32> to vector<4x96xf32>
    %cst_14 = arith.constant dense<0.000000e+00> : vector<4x256xf32>
    %42 = tpu.matmul %41, %39, %cst_14 {dimension_numbers = #tpu.dot_dimension_numbers<[1], [0], [0], [1], [0, 0, 1, 1], [], []>} : vector<4x96xf32>, vector<96x256xf32>, vector<4x256xf32> -> vector<4x256xf32>
    %43 = arith.addf %37, %42 : vector<4x256xf32>
    %c1 = arith.constant 1 : index
    %c0_15 = arith.constant 0 : index
    %c0_16 = arith.constant 0 : index
    %44 = vector.load %arg2[%c1, %c0_15, %c0_16] : memref<3x4x96xf32, #tpu.memory_space<vmem>>, vector<1x4x96xf32>
    %45 = vector.shape_cast %44 : vector<1x4x96xf32> to vector<4x96xf32>
    %cst_17 = arith.constant dense<0.000000e+00> : vector<4x256xf32>
    %46 = tpu.matmul %45, %32, %cst_17 {dimension_numbers = #tpu.dot_dimension_numbers<[1], [0], [0], [1], [0, 0, 1, 1], [], []>} : vector<4x96xf32>, vector<96x256xf32>, vector<4x256xf32> -> vector<4x256xf32>
    %47 = arith.addf %43, %46 : vector<4x256xf32>
    %48 = vector.extract_strided_slice %32 {offsets = [0, 16], sizes = [96, 240], strides = [1, 1]} : vector<96x256xf32> to vector<96x240xf32>
    %49 = tpu.concatenate %48, %33 in 1 : vector<96x240xf32>, vector<96x16xf32> -> vector<96x256xf32>
    %c2 = arith.constant 2 : index
    %c0_18 = arith.constant 0 : index
    %c0_19 = arith.constant 0 : index
    %50 = vector.load %arg2[%c2, %c0_18, %c0_19] : memref<3x4x96xf32, #tpu.memory_space<vmem>>, vector<1x4x96xf32>
    %51 = vector.shape_cast %50 : vector<1x4x96xf32> to vector<4x96xf32>
    %cst_20 = arith.constant dense<0.000000e+00> : vector<4x256xf32>
    %52 = tpu.matmul %51, %49, %cst_20 {dimension_numbers = #tpu.dot_dimension_numbers<[1], [0], [0], [1], [0, 0, 1, 1], [], []>} : vector<4x96xf32>, vector<96x256xf32>, vector<4x256xf32> -> vector<4x256xf32>
    %53 = arith.addf %47, %52 : vector<4x256xf32>
    %cst_21 = arith.constant -1.000000e+00 : f32
    %cst_22 = arith.constant 1.000000e+00 : f32
    %54 = vector.broadcast %cst_21 : f32 to vector<4x256xf32>
    %55 = arith.maximumf %54, %53 : vector<4x256xf32>
    %56 = vector.broadcast %cst_22 : f32 to vector<4x256xf32>
    %57 = arith.minimumf %56, %55 : vector<4x256xf32>
    %c0_23 = arith.constant 0 : index
    %c0_24 = arith.constant 0 : index
    %c0_25 = arith.constant 0 : index
    %58 = vector.load %arg4[%c0_23, %c0_24, %c0_25] : memref<1x4x256xf32, #tpu.memory_space<vmem>>, vector<1x4x256xf32>
    %59 = vector.shape_cast %58 : vector<1x4x256xf32> to vector<4x256xf32>
    %60 = vector.shape_cast %57 : vector<4x256xf32> to vector<1x4x256xf32>
    tpu.vector_store %arg4[%c0_23, %c0_24, %c0_25], %60 {strides = array<i32>} : memref<1x4x256xf32, #tpu.memory_space<vmem>>, vector<1x4x256xf32>,
    return
  }
  func.func @transform_0(%arg0: i32) -> (i32, i32, i32) {
    %c0_i32 = arith.constant 0 : i32
    %c0_i32_0 = arith.constant 0 : i32
    %c0_i32_1 = arith.constant 0 : i32
    return %arg0, %c0_i32, %c0_i32_0 : i32, i32, i32
  }
  func.func @transform_1(%arg0: i32) -> (i32, i32, i32) {
    %c0_i32 = arith.constant 0 : i32
    %c0_i32_0 = arith.constant 0 : i32
    %c0_i32_1 = arith.constant 0 : i32
    %c0_i32_2 = arith.constant 0 : i32
    return %c0_i32, %c0_i32_0, %c0_i32_1 : i32, i32, i32
  }
  func.func @transform_2(%arg0: i32) -> (i32, i32) {
    %c0_i32 = arith.constant 0 : i32
    %c0_i32_0 = arith.constant 0 : i32
    %c0_i32_1 = arith.constant 0 : i32
    return %c0_i32, %c0_i32_0 : i32, i32
  }
  func.func @transform_3(%arg0: i32) -> (i32, i32, i32) {
    %c0_i32 = arith.constant 0 : i32
    %c0_i32_0 = arith.constant 0 : i32
    %c0_i32_1 = arith.constant 0 : i32
    return %arg0, %c0_i32, %c0_i32_0 : i32, i32, i32
  }
}

</mosaic_0001>

<llo_original>
// kernel: inverse_conv_forward.1
$region0: #{inverse_conv_forward.1}
  #allocation0 [shape = 'u32[]', space=smem, size = 0x4, offset = 0x4, fixed_abs, tag = 'smem constant byte address 0x4 - core index']
  #allocation1 [shape = 'u32[144,128]{1,0:T(1,128)}', space=vmem, size = 0x12000, scoped, tag = 'internal scratch']
  %s0 = inlined_call_operand.vmem [shape: f32[2,32,256], index: 0, kind: input, shape index: {}]
  %s1 = inlined_call_operand.vmem [shape: f32[3,4,96], index: 1, kind: input, shape index: {}]
  %s2 = inlined_call_operand.vmem [shape: f32[4,1], index: 2, kind: input, shape index: {}]
  %s3 = inlined_call_operand.vmem [shape: f32[2,4,256], index: 3, kind: output, shape index: {}]
  %s4 = sld [smem:[#allocation0]]
  $region45: #{inverse_conv_forward.1} parent=0
    _
  %s6 = ssub.s32 1, %s4
  %s7 = scalar_select 0, %s6, %s4
  loop: start=0, step=1, limit=4
  $region2: #{inverse_conv_forward.1} parent=0 // loop_pre_header
    _
  $region3: #{inverse_conv_forward.1} parent=0 // loop_header
    %s9 = sphi 0, %s13
    %p10 = scmp.ge.s32.totalorder %s9, 4
    %s19 = sphi 0, %s21
    %s22 = sphi 0, %s19
    %s23 = sphi 0, %s22
    %s39 = sphi 0, %s23
    %s43 = sphi 0, %s43
    %s45 = sphi 0, %s43
    %s46 = sphi 0, %s45
    %s60 = sphi 0, %s46
    %s64 = sphi 0, %s64
    %s66 = sphi 0, %s64
    %s67 = sphi 0, %s66
    %s81 = sphi 0, %s67
    %s87 = sphi 0, %s89
    %s90 = sphi 0, %s87
    %s91 = sphi 0, %s90
    %s107 = sphi 0, %s91
  $region4: #{inverse_conv_forward.1} parent=0 // loop_header_branch
    %12 = sbr.rel (%p10) target = $region8
  $region5: #{inverse_conv_forward.1} parent=0 // loop_body
    %s14 = ssub.s32 %s9, 1
    %s15 = ssub.s32 %s9, 2
    %s16 = sadd.s32 %s9, 1
    %s17 = ssub.s32 %s9, %s16
    %p18 = scmp.eq.s32.totalorder %s17, 0
    %s20 = sadd.s32 %s19, 1
    %s21 = scalar_select %p18, %s19, %s20
    %p24 = pneg %p18
    %p25 = scmp.eq.s32.totalorder %s9, 1
    %p26 = por %p24, %p25
    %p27 = scmp.ne.s32.totalorder %s19, %s22
    %p28 = scmp.eq.s32.totalorder %s9, 0
    %p29 = por %p27, %p28
    %p30 = scmp.ne.s32.totalorder %s19, %s22
    %p31 = scmp.eq.s32.totalorder %s14, 1
    %p32 = por %p30, %p31
    %p33 = scmp.ne.s32.totalorder %s22, %s23
    %p34 = scmp.eq.s32.totalorder %s14, 0
    %p35 = por %p33, %p34
    %p36 = scmp.ne.s32.totalorder %s22, %s23
    %p37 = scmp.eq.s32.totalorder %s15, 1
    %p38 = por %p36, %p37
    %p40 = scmp.ne.s32.totalorder %s23, %s39
    %p41 = scmp.eq.s32.totalorder %s15, 0
    %p42 = por %p40, %p41
    %s44 = sadd.s32 %s43, 1
    %p47 = scmp.eq.s32.totalorder %s9, 1
    %p48 = scmp.ne.s32.totalorder %s43, %s45
    %p49 = scmp.eq.s32.totalorder %s9, 0
    %p50 = por %p48, %p49
    %p51 = scmp.ne.s32.totalorder %s43, %s45
    %p52 = scmp.eq.s32.totalorder %s14, 1
    %p53 = por %p51, %p52
    %p54 = scmp.ne.s32.totalorder %s45, %s46
    %p55 = scmp.eq.s32.totalorder %s14, 0
    %p56 = por %p54, %p55
    %p57 = scmp.ne.s32.totalorder %s45, %s46
    %p58 = scmp.eq.s32.totalorder %s15, 1
    %p59 = por %p57, %p58
    %p61 = scmp.ne.s32.totalorder %s46, %s60
    %p62 = scmp.eq.s32.totalorder %s15, 0
    %p63 = por %p61, %p62
    %s65 = sadd.s32 %s64, 1
    %p68 = scmp.eq.s32.totalorder %s9, 1
    %p69 = scmp.ne.s32.totalorder %s64, %s66
    %p70 = scmp.eq.s32.totalorder %s9, 0
    %p71 = por %p69, %p70
    %p72 = scmp.ne.s32.totalorder %s64, %s66
    %p73 = scmp.eq.s32.totalorder %s14, 1
    %p74 = por %p72, %p73
    %p75 = scmp.ne.s32.totalorder %s66, %s67
    %p76 = scmp.eq.s32.totalorder %s14, 0
    %p77 = por %p75, %p76
    %p78 = scmp.ne.s32.totalorder %s66, %s67
    %p79 = scmp.eq.s32.totalorder %s15, 1
    %p80 = por %p78, %p79
    %p82 = scmp.ne.s32.totalorder %s67, %s81
    %p83 = scmp.eq.s32.totalorder %s15, 0
    %p84 = por %p82, %p83
    %s85 = ssub.s32 %s9, %s16
    %p86 = scmp.eq.s32.totalorder %s85, 0
    %s88 = sadd.s32 %s87, 1
    %s89 = scalar_select %p86, %s87, %s88
    %p92 = pneg %p86
    %p93 = scmp.eq.s32.totalorder %s9, 1
    %p94 = por %p92, %p93
    %p95 = scmp.ne.s32.totalorder %s87, %s90
    %p96 = scmp.eq.s32.totalorder %s9, 0
    %p97 = por %p95, %p96
    %p98 = scmp.ne.s32.totalorder %s87, %s90
    %p99 = scmp.eq.s32.totalorder %s14, 1
    %p100 = por %p98, %p99
    %p101 = scmp.ne.s32.totalorder %s90, %s91
    %p102 = scmp.eq.s32.totalorder %s14, 0
    %p103 = por %p101, %p102
    %p104 = scmp.ne.s32.totalorder %s90, %s91
    %p105 = scmp.eq.s32.totalorder %s15, 1
    %p106 = por %p104, %p105
    %p108 = scmp.ne.s32.totalorder %s91, %s107
    %p109 = scmp.eq.s32.totalorder %s15, 0
    %p110 = por %p108, %p109
    %p111 = scmp.le.s32.totalorder 1, %s9
    %p112 = scmp.lt.s32.totalorder %s9, 3
    %p113 = pnand %p111, %p112
    %p114 = pneg %p113
    // Predicated region
    $region9: #{inverse_conv_forward.1} parent=5 // pred_check
      _
    $region10: #{inverse_conv_forward.1} parent=5 // pred_check_branch
      %116 = sbr.rel (%p113) target = $region12
    $region11: #{inverse_conv_forward.1} parent=5 // pred_region
      %s117 = ssub.s32 %s9, 1
      // Predicated region
      $region13: #{inverse_conv_forward.1} parent=11 // pred_check
        %p118 = pneg %p56
      $region14: #{inverse_conv_forward.1} parent=11 // pred_check_branch
        %120 = sbr.rel (%p118) target = $region16
      $region15: #{inverse_conv_forward.1} parent=11 // pred_region
        _
      $region16: #{inverse_conv_forward.1} parent=11 // pred_fallthru
        _
      // Predicated region
      $region17: #{inverse_conv_forward.1} parent=11 // pred_check
        %p121 = pneg %p77
      $region18: #{inverse_conv_forward.1} parent=11 // pred_check_branch
        %123 = sbr.rel (%p121) target = $region20
      $region19: #{inverse_conv_forward.1} parent=11 // pred_region
        _
      $region20: #{inverse_conv_forward.1} parent=11 // pred_fallthru
        _
    $region12: #{inverse_conv_forward.1} parent=5 // pred_fallthru
      _
    %p124 = scmp.lt.s32.totalorder %s9, 2
    // Predicated region
    $region21: #{inverse_conv_forward.1} parent=5 // pred_check
      %p125 = pneg %p124
    $region22: #{inverse_conv_forward.1} parent=5 // pred_check_branch
      %127 = sbr.rel (%p125) target = $region24
    $region23: #{inverse_conv_forward.1} parent=5 // pred_region
      // Predicated region
      $region25: #{inverse_conv_forward.1} parent=23 // pred_check
        %p128 = pneg %p29
      $region26: #{inverse_conv_forward.1} parent=23 // pred_check_branch
        %130 = sbr.rel (%p128) target = $region28
      $region27: #{inverse_conv_forward.1} parent=23 // pred_region
        %p131 = scmp.lt.s32.totalorder %s9, 1
        %s132 = scalar_select %p131, %s9, 1
        %s133 = smul.addr %s132, 8
        %s134 = smul.addr %s133, 8
        %s135 = scalar_lea.vmem %s0, %s134
      $region28: #{inverse_conv_forward.1} parent=23 // pred_fallthru
        _
    $region24: #{inverse_conv_forward.1} parent=5 // pred_fallthru
      _
    %p136 = scmp.le.s32.totalorder 1, %s9
    %p137 = scmp.lt.s32.totalorder %s9, 3
    %p138 = pnand %p136, %p137
    %p139 = pneg %p138
    // Predicated region
    $region29: #{inverse_conv_forward.1} parent=5 // pred_check
      _
    $region30: #{inverse_conv_forward.1} parent=5 // pred_check_branch
      %141 = sbr.rel (%p138) target = $region32
    $region31: #{inverse_conv_forward.1} parent=5 // pred_region
      %s142 = ssub.s32 %s9, 1
      %p143 = scmp.lt.s32.totalorder %s14, 1
      %s144 = scalar_select %p143, %s14, 1
      %s145 = smul.addr %s144, 8
      %s146 = smul.addr %s145, 8
      %s147 = scalar_lea.vmem %s0, %s146
      %p148 = pneg %p35
      %p149 = pneg %p32
      %p150 = pneg %p56
      %p151 = pneg %p53
      %p152 = pneg %p77
      %p153 = pneg %p74
      %p154 = pneg %p103
      %p155 = pneg %p100
      %p156 = scmp.lt.s32.totalorder %s14, 1
      %s157 = scalar_select %p156, %s14, 1
      %s158 = smul.addr %s157, 2
      %s159 = smul.addr %s158, 4
      %s160 = scalar_lea.vmem %s3, %s159
      %p161 = scmp.lt.s32.totalorder %s14, 1
      %s162 = scalar_select %p161, %s14, 1
      %s163 = smul.addr %s162, 8
      %s164 = smul.addr %s163, 8
      %s165 = scalar_lea.vmem %s0, %s164
      %p166 = scmp.lt.s32.totalorder %s14, 1
      %s167 = scalar_select %p166, %s14, 1
      %s168 = smul.addr %s167, 2
      %s169 = smul.addr %s168, 4
      %s170 = scalar_lea.vmem %s3, %s169
      %v171 = vld [vmem:[%s165] sm:$0xff]
      %v172 = vld [vmem:[%s165 + $0x8] sm:$0xff]
      %v173 = vld [vmem:[%s165 + $0x10] sm:$0xff]
      %v174 = vld [vmem:[%s165 + $0x18] sm:$0xff]
      %v175 = vld [vmem:[%s165 + $0x20] sm:$0xff]
      %v176 = vld [vmem:[%s165 + $0x28] sm:$0xff]
      %v177 = vld [vmem:[%s165 + $0x30] sm:$0xff]
      %v178 = vld [vmem:[%s165 + $0x38] sm:$0xff]
      %v179 = vlaneseq
      %v180 = vand.u32 %v179, 127
      %v181 = vadd.s32 %v180, 128
      %vm182 = vcmp.lt.s32.totalorder %v180, 0
      %v183 = vsub.s32 0, %v180
      %v184 = vsel %vm182, %v183, %v180
      %v185 = vshrl.u32 %v184, 4
      %v186 = vand.u32 %v184, 15
      %v187 = vsub.s32 0, %v186
      %v188 = vsel %vm182, %v187, %v186
      %vm189 = vcmp.lt.s32.totalorder %v181, 0
      %v190 = vsub.s32 0, %v181
      %v191 = vsel %vm189, %v190, %v181
      %v192 = vshrl.u32 %v191, 4
      %v193 = vand.u32 %v191, 15
      %v194 = vsub.s32 0, %v193
      %v195 = vsel %vm189, %v194, %v193
      %vm196 = vcmp.ne.s32.totalorder %v188, 0
      %vm197 = vcmp.ne.s32.totalorder %v195, 0
      %vm198 = vcmp.lt.s32.totalorder %v188, 0
      %vm199 = vcmp.lt.s32.totalorder %v195, 0
      %vm200 = vmand %vm198, %vm196
      %vm201 = vmand %vm199, %vm197
      %v202 = vadd.s32 %v188, 16
      %v203 = vadd.s32 %v195, 16
      %v204 = vsel %vm200, %v202, %v188
      %v205 = vsel %vm201, %v203, %v195
      %vm206 = vcmp.eq.s32.totalorder %v204, 0
      %vm207 = vcmp.eq.s32.totalorder %v205, 0
      %216 = vrot.lane.b32.xlu0 %v171, 1
      %v217 = vpop.permute.xlu0 %216
      %218 = vrot.lane.b32.xlu0 %v172, 1
      %v219 = vpop.permute.xlu0 %218
      %220 = vrot.lane.b32.xlu0 %v173, 1
      %v221 = vpop.permute.xlu0 %220
      %222 = vrot.lane.b32.xlu0 %v174, 1
      %v223 = vpop.permute.xlu0 %222
      %224 = vrot.lane.b32.xlu0 %v175, 1
      %v225 = vpop.permute.xlu0 %224
      %226 = vrot.lane.b32.xlu0 %v176, 1
      %v227 = vpop.permute.xlu0 %226
      %228 = vrot.lane.b32.xlu0 %v177, 1
      %v229 = vpop.permute.xlu0 %228
      %230 = vrot.lane.b32.xlu0 %v178, 1
      %v231 = vpop.permute.xlu0 %230
      %vm232 = vcmask 7168
      %v233 = vsel %vm232, %v217, %v219
      %v234 = vsel %vm232, %v221, %v223
      %v235 = vsel %vm232, %v225, %v227
      %v236 = vsel %vm232, %v229, %v231
      %v245 = vsel %vm232, 0.0, %v217
      %v246 = vsel %vm232, 0.0, %v221
      %v247 = vsel %vm232, 0.0, %v225
      %v248 = vsel %vm232, 0.0, %v229
      %v249 = vsel %vm206, 0.0, %v245
      %v250 = vsel %vm207, 0.0, %v233
      %v251 = vsel %vm206, 0.0, %v246
      %v252 = vsel %vm207, 0.0, %v234
      %v253 = vsel %vm206, 0.0, %v247
      %v254 = vsel %vm207, 0.0, %v235
      %v255 = vsel %vm206, 0.0, %v248
      %v256 = vsel %vm207, 0.0, %v236
      %vm257 = vcmp.eq.s32.totalorder %v204, 15
      %vm258 = vcmp.eq.s32.totalorder %v205, 15
      %259 = vrot.lane.b32.xlu0 %v171, 127
      %v260 = vpop.permute.xlu0 %259
      %261 = vrot.lane.b32.xlu0 %v172, 127
      %v262 = vpop.permute.xlu0 %261
      %263 = vrot.lane.b32.xlu0 %v173, 127
      %v264 = vpop.permute.xlu0 %263
      %265 = vrot.lane.b32.xlu0 %v174, 127
      %v266 = vpop.permute.xlu0 %265
      %267 = vrot.lane.b32.xlu0 %v175, 127
      %v268 = vpop.permute.xlu0 %267
      %269 = vrot.lane.b32.xlu0 %v176, 127
      %v270 = vpop.permute.xlu0 %269
      %271 = vrot.lane.b32.xlu0 %v177, 127
      %v272 = vpop.permute.xlu0 %271
      %273 = vrot.lane.b32.xlu0 %v178, 127
      %v274 = vpop.permute.xlu0 %273
      %vm275 = vcmask 1039360
      %v276 = vsel %vm275, %v260, %v262
      %v277 = vsel %vm275, %v264, %v266
      %v278 = vsel %vm275, %v268, %v270
      %v279 = vsel %vm275, %v272, %v274
      %v288 = vsel %vm275, %v262, 0.0
      %v289 = vsel %vm275, %v266, 0.0
      %v290 = vsel %vm275, %v270, 0.0
      %v291 = vsel %vm275, %v274, 0.0
      %v292 = vsel %vm257, 0.0, %v276
      %v293 = vsel %vm258, 0.0, %v288
      %v294 = vsel %vm257, 0.0, %v277
      %v295 = vsel %vm258, 0.0, %v289
      %v296 = vsel %vm257, 0.0, %v278
      %v297 = vsel %vm258, 0.0, %v290
      %v298 = vsel %vm257, 0.0, %v279
      %v299 = vsel %vm258, 0.0, %v291
      %v300 = vld [vmem:[%s2] sm:$0xf]
      %302 = vset.pattern.permute.xlu0 0
      %303 = vperm.xlu0 %302, %v300
      %v304 = vpop.permute.xlu0 %303
      %v306 = vadd.f32 %v171, %v304
      %v307 = vadd.f32 %v172, %v304
      %324 = vrot.lane.b32.xlu0 %v249, 16
      %v325 = vpop.permute.xlu0 %324
      %326 = vrot.lane.b32.xlu0 %v250, 16
      %v327 = vpop.permute.xlu0 %326
      %328 = vrot.lane.b32.xlu0 %v251, 16
      %v329 = vpop.permute.xlu0 %328
      %330 = vrot.lane.b32.xlu0 %v252, 16
      %v331 = vpop.permute.xlu0 %330
      %332 = vrot.lane.b32.xlu0 %v253, 16
      %v333 = vpop.permute.xlu0 %332
      %334 = vrot.lane.b32.xlu0 %v254, 16
      %v335 = vpop.permute.xlu0 %334
      %336 = vrot.lane.b32.xlu0 %v255, 16
      %v337 = vpop.permute.xlu0 %336
      %338 = vrot.lane.b32.xlu0 %v256, 16
      %v339 = vpop.permute.xlu0 %338
      %340 = vrot.lane.b32.xlu0 %v171, 16
      %v341 = vpop.permute.xlu0 %340
      %342 = vrot.lane.b32.xlu0 %v172, 16
      %v343 = vpop.permute.xlu0 %342
      %344 = vrot.lane.b32.xlu0 %v173, 16
      %v345 = vpop.permute.xlu0 %344
      %346 = vrot.lane.b32.xlu0 %v174, 16
      %v347 = vpop.permute.xlu0 %346
      %348 = vrot.lane.b32.xlu0 %v175, 16
      %v349 = vpop.permute.xlu0 %348
      %350 = vrot.lane.b32.xlu0 %v176, 16
      %v351 = vpop.permute.xlu0 %350
      %352 = vrot.lane.b32.xlu0 %v177, 16
      %v353 = vpop.permute.xlu0 %352
      %354 = vrot.lane.b32.xlu0 %v178, 16
      %v355 = vpop.permute.xlu0 %354
      %356 = vrot.lane.b32.xlu0 %v292, 16
      %v357 = vpop.permute.xlu0 %356
      %358 = vrot.lane.b32.xlu0 %v293, 16
      %v359 = vpop.permute.xlu0 %358
      %360 = vrot.lane.b32.xlu0 %v294, 16
      %v361 = vpop.permute.xlu0 %360
      %362 = vrot.lane.b32.xlu0 %v295, 16
      %v363 = vpop.permute.xlu0 %362
      %364 = vrot.lane.b32.xlu0 %v296, 16
      %v365 = vpop.permute.xlu0 %364
      %366 = vrot.lane.b32.xlu0 %v297, 16
      %v367 = vpop.permute.xlu0 %366
      %368 = vrot.lane.b32.xlu0 %v298, 16
      %v369 = vpop.permute.xlu0 %368
      %370 = vrot.lane.b32.xlu0 %v299, 16
      %v371 = vpop.permute.xlu0 %370
      %vm372 = vcmask 130048
      %v373 = vsel %vm372, %v325, %v327
      %v374 = vsel %vm372, %v329, %v331
      %v375 = vsel %vm372, %v333, %v335
      %v376 = vsel %vm372, %v337, %v339
      %v377 = vsel %vm372, %v341, %v343
      %v378 = vsel %vm372, %v345, %v347
      %v379 = vsel %vm372, %v349, %v351
      %v380 = vsel %vm372, %v353, %v355
      %v381 = vsel %vm372, %v357, %v359
      %v382 = vsel %vm372, %v361, %v363
      %v383 = vsel %vm372, %v365, %v367
      %v384 = vsel %vm372, %v369, %v371
      %v409 = vsel %vm372, 0.0, %v325
      %v410 = vsel %vm372, 0.0, %v329
      %v411 = vsel %vm372, 0.0, %v333
      %v412 = vsel %vm372, 0.0, %v337
      %v413 = vsel %vm372, 0.0, %v341
      %v414 = vsel %vm372, 0.0, %v345
      %v415 = vsel %vm372, 0.0, %v349
      %v416 = vsel %vm372, 0.0, %v353
      %v417 = vsel %vm372, 0.0, %v357
      %v418 = vsel %vm372, 0.0, %v361
      %v419 = vsel %vm372, 0.0, %v365
      %v420 = vsel %vm372, 0.0, %v369
      %v421 = vld [vmem:[%s1] sm:$0xf]
      %vm422 = vcmask 785408
      %v424 = vsel %vm422, %v421, 0
      %426 = vmatprep.subr.mxu0 0.0
      %427 = vmatpush1.msra.mxu0 0.0
      %428 = vmatprep.subr.mxu0 0.0
      %429 = vmatpush1.msra.mxu0 0.0
      %430 = vmatprep.subr.mxu0 0.0
      %431 = vmatpush1.msra.mxu0 0.0
      %432 = vmatprep.subr.mxu0 0.0
      %433 = vmatpush1.msra.mxu0 0.0
      %434 = vmatprep.subr.mxu0 %v384
      %435 = vmatpush1.msra.mxu0 %v420
      %436 = vmatprep.subr.mxu0 %v383
      %437 = vmatpush1.msra.mxu0 %v419
      %438 = vmatprep.subr.mxu0 %v382
      %439 = vmatpush1.msra.mxu0 %v418
      %440 = vmatprep.subr.mxu0 %v381
      %441 = vmatpush1.msra.mxu0 %v417
      %442 = vmatprep.subr.mxu0 %v380
      %443 = vmatpush1.msra.mxu0 %v416
      %444 = vmatprep.subr.mxu0 %v379
      %445 = vmatpush1.msra.mxu0 %v415
      %446 = vmatprep.subr.mxu0 %v378
      %447 = vmatpush1.msra.mxu0 %v414
      %448 = vmatprep.subr.mxu0 %v377
      %449 = vmatpush1.msra.mxu0 %v413
      %450 = vmatprep.subr.mxu0 %v376
      %451 = vmatpush1.msra.mxu0 %v412
      %452 = vmatprep.subr.mxu0 %v375
      %453 = vmatpush1.msra.mxu0 %v411
      %454 = vmatprep.subr.mxu0 %v374
      %455 = vmatpush1.msra.mxu0 %v410
      %456 = vmatprep.subr.mxu0 %v373
      %457 = vmatpush1.msra.mxu0 %v409
      %458 = vmatprep.subr.mxu0 0.0
      %459 = vmatpush2.msra.mxu0 0.0
      %460 = vmatprep.subr.mxu0 0.0
      %461 = vmatpush2.msra.mxu0 0.0
      %462 = vmatprep.subr.mxu0 0.0
      %463 = vmatpush2.msra.mxu0 0.0
      %464 = vmatprep.subr.mxu0 0.0
      %465 = vmatpush2.msra.mxu0 0.0
      %466 = vmatprep.subr.mxu0 0.0
      %467 = vmatpush2.msra.mxu0 0.0
      %468 = vmatprep.subr.mxu0 0.0
      %469 = vmatpush2.msra.mxu0 0.0
      %470 = vmatprep.subr.mxu0 0.0
      %471 = vmatpush2.msra.mxu0 0.0
      %472 = vmatprep.subr.mxu0 0.0
      %473 = vmatpush2.msra.mxu0 0.0
      %474 = vmatprep.subr.mxu0 0.0
      %475 = vmatpush2.msra.mxu0 0.0
      %476 = vmatprep.subr.mxu0 0.0
      %477 = vmatpush2.msra.mxu0 0.0
      %478 = vmatprep.subr.mxu0 0.0
      %479 = vmatpush2.msra.mxu0 0.0
      %480 = vmatprep.subr.mxu0 0.0
      %481 = vmatpush2.msra.mxu0 0.0
      %482 = vmatprep.subr.mxu0 0.0
      %483 = vmatpush2.msra.mxu0 0.0
      %484 = vmatprep.subr.mxu0 0.0
      %485 = vmatpush2.msra.mxu0 0.0
      %486 = vmatprep.subr.mxu0 0.0
      %487 = vmatpush2.msra.mxu0 0.0
      %488 = vmatprep.subr.mxu0 0.0
      %489 = vmatpush2.msra.mxu0 0.0
      %490 = vmatprep.mubr.f32.mxu0 0.0
      %491 = vmatmul.mubr.f32.gmra.mxu0 %v424
      %v492 = vpop.f32.mrf.mxu0
      %v493 = vadd.f32 0.0, %v492
      %v494 = vpop.f32.mrf.mxu0
      %v495 = vadd.f32 0.0, %v494
      %496 = vdwg.mxu0
      %v497 = vadd.f32 %v306, %v493
      %v498 = vadd.f32 %v307, %v495
      %s499 = scalar_lea.vmem %s1, 4
      %v500 = vld [vmem:[%s499] sm:$0xf]
      %v502 = vsel %vm422, %v500, 0
      %504 = vmatprep.subr.mxu0 0.0
      %505 = vmatpush1.msra.mxu0 0.0
      %506 = vmatprep.subr.mxu0 0.0
      %507 = vmatpush1.msra.mxu0 0.0
      %508 = vmatprep.subr.mxu0 0.0
      %509 = vmatpush1.msra.mxu0 0.0
      %510 = vmatprep.subr.mxu0 0.0
      %511 = vmatpush1.msra.mxu0 0.0
      %512 = vmatprep.subr.mxu0 %v299
      %513 = vmatpush1.msra.mxu0 %v298
      %514 = vmatprep.subr.mxu0 %v297
      %515 = vmatpush1.msra.mxu0 %v296
      %516 = vmatprep.subr.mxu0 %v295
      %517 = vmatpush1.msra.mxu0 %v294
      %518 = vmatprep.subr.mxu0 %v293
      %519 = vmatpush1.msra.mxu0 %v292
      %520 = vmatprep.subr.mxu0 %v178
      %521 = vmatpush1.msra.mxu0 %v177
      %522 = vmatprep.subr.mxu0 %v176
      %523 = vmatpush1.msra.mxu0 %v175
      %524 = vmatprep.subr.mxu0 %v174
      %525 = vmatpush1.msra.mxu0 %v173
      %526 = vmatprep.subr.mxu0 %v172
      %527 = vmatpush1.msra.mxu0 %v171
      %528 = vmatprep.subr.mxu0 %v256
      %529 = vmatpush1.msra.mxu0 %v255
      %530 = vmatprep.subr.mxu0 %v254
      %531 = vmatpush1.msra.mxu0 %v253
      %532 = vmatprep.subr.mxu0 %v252
      %533 = vmatpush1.msra.mxu0 %v251
      %534 = vmatprep.subr.mxu0 %v250
      %535 = vmatpush1.msra.mxu0 %v249
      %536 = vmatprep.subr.mxu0 0.0
      %537 = vmatpush2.msra.mxu0 0.0
      %538 = vmatprep.subr.mxu0 0.0
      %539 = vmatpush2.msra.mxu0 0.0
      %540 = vmatprep.subr.mxu0 0.0
      %541 = vmatpush2.msra.mxu0 0.0
      %542 = vmatprep.subr.mxu0 0.0
      %543 = vmatpush2.msra.mxu0 0.0
      %544 = vmatprep.subr.mxu0 0.0
      %545 = vmatpush2.msra.mxu0 0.0
      %546 = vmatprep.subr.mxu0 0.0
      %547 = vmatpush2.msra.mxu0 0.0
      %548 = vmatprep.subr.mxu0 0.0
      %549 = vmatpush2.msra.mxu0 0.0
      %550 = vmatprep.subr.mxu0 0.0
      %551 = vmatpush2.msra.mxu0 0.0
      %552 = vmatprep.subr.mxu0 0.0
      %553 = vmatpush2.msra.mxu0 0.0
      %554 = vmatprep.subr.mxu0 0.0
      %555 = vmatpush2.msra.mxu0 0.0
      %556 = vmatprep.subr.mxu0 0.0
      %557 = vmatpush2.msra.mxu0 0.0
      %558 = vmatprep.subr.mxu0 0.0
      %559 = vmatpush2.msra.mxu0 0.0
      %560 = vmatprep.subr.mxu0 0.0
      %561 = vmatpush2.msra.mxu0 0.0
      %562 = vmatprep.subr.mxu0 0.0
      %563 = vmatpush2.msra.mxu0 0.0
      %564 = vmatprep.subr.mxu0 0.0
      %565 = vmatpush2.msra.mxu0 0.0
      %566 = vmatprep.subr.mxu0 0.0
      %567 = vmatpush2.msra.mxu0 0.0
      %568 = vmatprep.mubr.f32.mxu0 0.0
      %569 = vmatmul.mubr.f32.gmra.mxu0 %v502
      %v570 = vpop.f32.mrf.mxu0
      %v571 = vadd.f32 0.0, %v570
      %v572 = vpop.f32.mrf.mxu0
      %v573 = vadd.f32 0.0, %v572
      %574 = vdwg.mxu0
      %v575 = vadd.f32 %v497, %v571
      %v576 = vadd.f32 %v498, %v573
      %577 = vrot.lane.b32.xlu0 %v249, 112
      %v578 = vpop.permute.xlu0 %577
      %579 = vrot.lane.b32.xlu0 %v250, 112
      %v580 = vpop.permute.xlu0 %579
      %581 = vrot.lane.b32.xlu0 %v251, 112
      %v582 = vpop.permute.xlu0 %581
      %583 = vrot.lane.b32.xlu0 %v252, 112
      %v584 = vpop.permute.xlu0 %583
      %585 = vrot.lane.b32.xlu0 %v253, 112
      %v586 = vpop.permute.xlu0 %585
      %587 = vrot.lane.b32.xlu0 %v254, 112
      %v588 = vpop.permute.xlu0 %587
      %589 = vrot.lane.b32.xlu0 %v255, 112
      %v590 = vpop.permute.xlu0 %589
      %591 = vrot.lane.b32.xlu0 %v256, 112
      %v592 = vpop.permute.xlu0 %591
      %593 = vrot.lane.b32.xlu0 %v171, 112
      %v594 = vpop.permute.xlu0 %593
      %595 = vrot.lane.b32.xlu0 %v172, 112
      %v596 = vpop.permute.xlu0 %595
      %597 = vrot.lane.b32.xlu0 %v173, 112
      %v598 = vpop.permute.xlu0 %597
      %599 = vrot.lane.b32.xlu0 %v174, 112
      %v600 = vpop.permute.xlu0 %599
      %601 = vrot.lane.b32.xlu0 %v175, 112
      %v602 = vpop.permute.xlu0 %601
      %603 = vrot.lane.b32.xlu0 %v176, 112
      %v604 = vpop.permute.xlu0 %603
      %605 = vrot.lane.b32.xlu0 %v177, 112
      %v606 = vpop.permute.xlu0 %605
      %607 = vrot.lane.b32.xlu0 %v178, 112
      %v608 = vpop.permute.xlu0 %607
      %609 = vrot.lane.b32.xlu0 %v292, 112
      %v610 = vpop.permute.xlu0 %609
      %611 = vrot.lane.b32.xlu0 %v293, 112
      %v612 = vpop.permute.xlu0 %611
      %613 = vrot.lane.b32.xlu0 %v294, 112
      %v614 = vpop.permute.xlu0 %613
      %615 = vrot.lane.b32.xlu0 %v295, 112
      %v616 = vpop.permute.xlu0 %615
      %617 = vrot.lane.b32.xlu0 %v296, 112
      %v618 = vpop.permute.xlu0 %617
      %619 = vrot.lane.b32.xlu0 %v297, 112
      %v620 = vpop.permute.xlu0 %619
      %621 = vrot.lane.b32.xlu0 %v298, 112
      %v622 = vpop.permute.xlu0 %621
      %623 = vrot.lane.b32.xlu0 %v299, 112
      %v624 = vpop.permute.xlu0 %623
      %vm625 = vcmask 916480
      %v626 = vsel %vm625, %v578, %v580
      %v627 = vsel %vm625, %v582, %v584
      %v628 = vsel %vm625, %v586, %v588
      %v629 = vsel %vm625, %v590, %v592
      %v630 = vsel %vm625, %v594, %v596
      %v631 = vsel %vm625, %v598, %v600
      %v632 = vsel %vm625, %v602, %v604
      %v633 = vsel %vm625, %v606, %v608
      %v634 = vsel %vm625, %v610, %v612
      %v635 = vsel %vm625, %v614, %v616
      %v636 = vsel %vm625, %v618, %v620
      %v637 = vsel %vm625, %v622, %v624
      %v662 = vsel %vm625, %v580, 0.0
      %v663 = vsel %vm625, %v584, 0.0
      %v664 = vsel %vm625, %v588, 0.0
      %v665 = vsel %vm625, %v592, 0.0
      %v666 = vsel %vm625, %v596, 0.0
      %v667 = vsel %vm625, %v600, 0.0
      %v668 = vsel %vm625, %v604, 0.0
      %v669 = vsel %vm625, %v608, 0.0
      %v670 = vsel %vm625, %v612, 0.0
      %v671 = vsel %vm625, %v616, 0.0
      %v672 = vsel %vm625, %v620, 0.0
      %v673 = vsel %vm625, %v624, 0.0
      %s674 = scalar_lea.vmem %s1, 8
      %v675 = vld [vmem:[%s674] sm:$0xf]
      %v677 = vsel %vm422, %v675, 0
      %679 = vmatprep.subr.mxu0 0.0
      %680 = vmatpush1.msra.mxu0 0.0
      %681 = vmatprep.subr.mxu0 0.0
      %682 = vmatpush1.msra.mxu0 0.0
      %683 = vmatprep.subr.mxu0 0.0
      %684 = vmatpush1.msra.mxu0 0.0
      %685 = vmatprep.subr.mxu0 0.0
      %686 = vmatpush1.msra.mxu0 0.0
      %687 = vmatprep.subr.mxu0 %v673
      %688 = vmatpush1.msra.mxu0 %v637
      %689 = vmatprep.subr.mxu0 %v672
      %690 = vmatpush1.msra.mxu0 %v636
      %691 = vmatprep.subr.mxu0 %v671
      %692 = vmatpush1.msra.mxu0 %v635
      %693 = vmatprep.subr.mxu0 %v670
      %694 = vmatpush1.msra.mxu0 %v634
      %695 = vmatprep.subr.mxu0 %v669
      %696 = vmatpush1.msra.mxu0 %v633
      %697 = vmatprep.subr.mxu0 %v668
      %698 = vmatpush1.msra.mxu0 %v632
      %699 = vmatprep.subr.mxu0 %v667
      %700 = vmatpush1.msra.mxu0 %v631
      %701 = vmatprep.subr.mxu0 %v666
      %702 = vmatpush1.msra.mxu0 %v630
      %703 = vmatprep.subr.mxu0 %v665
      %704 = vmatpush1.msra.mxu0 %v629
      %705 = vmatprep.subr.mxu0 %v664
      %706 = vmatpush1.msra.mxu0 %v628
      %707 = vmatprep.subr.mxu0 %v663
      %708 = vmatpush1.msra.mxu0 %v627
      %709 = vmatprep.subr.mxu0 %v662
      %710 = vmatpush1.msra.mxu0 %v626
      %711 = vmatprep.subr.mxu0 0.0
      %712 = vmatpush2.msra.mxu0 0.0
      %713 = vmatprep.subr.mxu0 0.0
      %714 = vmatpush2.msra.mxu0 0.0
      %715 = vmatprep.subr.mxu0 0.0
      %716 = vmatpush2.msra.mxu0 0.0
      %717 = vmatprep.subr.mxu0 0.0
      %718 = vmatpush2.msra.mxu0 0.0
      %719 = vmatprep.subr.mxu0 0.0
      %720 = vmatpush2.msra.mxu0 0.0
      %721 = vmatprep.subr.mxu0 0.0
      %722 = vmatpush2.msra.mxu0 0.0
      %723 = vmatprep.subr.mxu0 0.0
      %724 = vmatpush2.msra.mxu0 0.0
      %725 = vmatprep.subr.mxu0 0.0
      %726 = vmatpush2.msra.mxu0 0.0
      %727 = vmatprep.subr.mxu0 0.0
      %728 = vmatpush2.msra.mxu0 0.0
      %729 = vmatprep.subr.mxu0 0.0
      %730 = vmatpush2.msra.mxu0 0.0
      %731 = vmatprep.subr.mxu0 0.0
      %732 = vmatpush2.msra.mxu0 0.0
      %733 = vmatprep.subr.mxu0 0.0
      %734 = vmatpush2.msra.mxu0 0.0
      %735 = vmatprep.subr.mxu0 0.0
      %736 = vmatpush2.msra.mxu0 0.0
      %737 = vmatprep.subr.mxu0 0.0
      %738 = vmatpush2.msra.mxu0 0.0
      %739 = vmatprep.subr.mxu0 0.0
      %740 = vmatpush2.msra.mxu0 0.0
      %741 = vmatprep.subr.mxu0 0.0
      %742 = vmatpush2.msra.mxu0 0.0
      %743 = vmatprep.mubr.f32.mxu0 0.0
      %744 = vmatmul.mubr.f32.gmra.mxu0 %v677
      %v745 = vpop.f32.mrf.mxu0
      %v746 = vadd.f32 0.0, %v745
      %v747 = vpop.f32.mrf.mxu0
      %v748 = vadd.f32 0.0, %v747
      %749 = vdwg.mxu0
      %v750 = vadd.f32 %v575, %v746
      %v751 = vadd.f32 %v576, %v748
      %v752 = vmax.f32 %v750, -1.0
      %v753 = vmax.f32 %v751, -1.0
      %v754 = vmin.f32 %v752, 1.0
      %v755 = vmin.f32 %v753, 1.0
      %v758 = vcombine.low %v754, %v755
      %760 = vst [vmem:[%s170] sm:$0xff] %v758
      %p761 = scmp.lt.s32.totalorder %s14, 1
      %s762 = scalar_select %p761, %s14, 1
      %s763 = smul.addr %s762, 2
      %s764 = smul.addr %s763, 4
      %s765 = scalar_lea.vmem %s3, %s764
      // Predicated region
      $region33: #{inverse_conv_forward.1} parent=31 // pred_check
        %p766 = pneg %p100
      $region34: #{inverse_conv_forward.1} parent=31 // pred_check_branch
        %768 = sbr.rel (%p766) target = $region36
      $region35: #{inverse_conv_forward.1} parent=31 // pred_region
        _
      $region36: #{inverse_conv_forward.1} parent=31 // pred_fallthru
        _
    $region32: #{inverse_conv_forward.1} parent=5 // pred_fallthru
      _
    %p769 = scmp.le.s32.totalorder 2, %s9
    // Predicated region
    $region37: #{inverse_conv_forward.1} parent=5 // pred_check
      %p770 = pneg %p769
    $region38: #{inverse_conv_forward.1} parent=5 // pred_check_branch
      %772 = sbr.rel (%p770) target = $region40
    $region39: #{inverse_conv_forward.1} parent=5 // pred_region
      %s773 = ssub.s32 %s9, 2
      // Predicated region
      $region41: #{inverse_conv_forward.1} parent=39 // pred_check
        %p774 = pneg %p106
      $region42: #{inverse_conv_forward.1} parent=39 // pred_check_branch
        %776 = sbr.rel (%p774) target = $region44
      $region43: #{inverse_conv_forward.1} parent=39 // pred_region
        %p777 = scmp.lt.s32.totalorder %s15, 1
        %s778 = scalar_select %p777, %s15, 1
        %s779 = smul.addr %s778, 2
        %s780 = smul.addr %s779, 4
        %s781 = scalar_lea.vmem %s3, %s780
      $region44: #{inverse_conv_forward.1} parent=39 // pred_fallthru
        _
    $region40: #{inverse_conv_forward.1} parent=5 // pred_fallthru
      _
  $region6: #{inverse_conv_forward.1} parent=0 // loop_footer
    %s13 = sadd.s32 1, %s9
  $region7: #{inverse_conv_forward.1} parent=0 // loop_footer_branch
    %8 = sbr.rel target = $region3
  $region8: #{inverse_conv_forward.1} parent=0 // loop_exit
    _

</llo_original>
